<compile_context>
chip_gen: v7x
topology: tpu7x:2x2x1
jax: 0.10.0
libtpu: 0.0.40
codegen_flags: <defaults>
</compile_context>

<pallas_src>
import functools

import numpy as np
import jax
import jax.numpy as jnp
from jax.experimental import pallas as pl
from jax.experimental.pallas import tpu as pltpu


def _attn_kernel(x_ref, pool_ref, up_ref, w1t_ref, b1_ref, w2t_ref, b2_ref, o_ref):
    # x_ref: (1, C, H*W) VMEM tile for one batch element (channels-first, flat spatial).
    x = x_ref[0].astype(jnp.float32)                                   # (C, HW)

    # AvgPool2d (count_include_pad=False) as one MXU matmul with a constant
    # averaging matrix (1/valid_count already folded in).
    pooled = jnp.dot(x, pool_ref[...], preferred_element_type=jnp.float32)   # (C, P)

    # 1x1 conv -> ReLU -> 1x1 conv -> Sigmoid, channels-first (torch weight layout).
    h = jnp.dot(w1t_ref[...], pooled, preferred_element_type=jnp.float32)    # (Cr, P)
    h = jnp.maximum(h + b1_ref[...], 0.0)
    y = jnp.dot(w2t_ref[...], h, preferred_element_type=jnp.float32)         # (C, P)
    y = jax.nn.sigmoid(y + b2_ref[...])

    # Nearest upsample + crop as one MXU matmul with a constant 0/1 matrix.
    y_up = jnp.dot(y, up_ref[...], preferred_element_type=jnp.float32)       # (C, HW)

    o_ref[0] = (x * y_up).astype(o_ref.dtype)


def _pool_upsample_mats(H, W, stride):
    """Constant pooling / upsample matrices (built at trace time with numpy)."""
    pad = stride - 1
    ksz = 2 * stride - 1
    Hp = (H + 2 * pad - ksz) // stride + 1
    Wp = (W + 2 * pad - ksz) // stride + 1

    pool = np.zeros((H * W, Hp * Wp), np.float32)   # pooled^T = x @ pool
    up = np.zeros((Hp * Wp, H * W), np.float32)     # y_up     = y @ up
    for i in range(Hp):
        h0 = max(0, i * stride - pad)
        h1 = min(H, i * stride - pad + ksz)
        for j in range(Wp):
            c0 = max(0, j * stride - pad)
            c1 = min(W, j * stride - pad + ksz)
            cnt = float((h1 - h0) * (c1 - c0))       # count_include_pad=False
            p = i * Wp + j
            for r in range(h0, h1):
                for c in range(c0, c1):
                    pool[r * W + c, p] = 1.0 / cnt
    for r in range(H):
        for c in range(W):
            up[(r // stride) * Wp + (c // stride), r * W + c] = 1.0
    return jnp.asarray(pool), jnp.asarray(up), Hp, Wp


def attention_block(x_nchw, w1, b1, w2, b2, *, stride):
    """x_nchw: (B, C, H, W) float32.  w1: (C, Cr), b1: (Cr,), w2: (Cr, C), b2: (C,)."""
    B, C, H, W = x_nchw.shape
    Cr = w1.shape[1]
    HW = H * W

    pool_t, up_t, Hp, Wp = _pool_upsample_mats(H, W, stride)
    P = Hp * Wp

    x = x_nchw.reshape(B, C, HW)        # pure reshape, no transpose
    w1t = w1.T                          # (Cr, C)  -- native torch conv layout
    w2t = w2.T                          # (C, Cr)
    b1c = b1.reshape(Cr, 1)
    b2c = b2.reshape(C, 1)

    out = pl.pallas_call(
        _attn_kernel,
        out_shape=jax.ShapeDtypeStruct((B, C, HW), x.dtype),
        grid=(B,),
        in_specs=[
            pl.BlockSpec((1, C, HW), lambda b: (b, 0, 0)),
            pl.BlockSpec((HW, P), lambda b: (0, 0)),
            pl.BlockSpec((P, HW), lambda b: (0, 0)),
            pl.BlockSpec((Cr, C), lambda b: (0, 0)),
            pl.BlockSpec((Cr, 1), lambda b: (0, 0)),
            pl.BlockSpec((C, Cr), lambda b: (0, 0)),
            pl.BlockSpec((C, 1), lambda b: (0, 0)),
        ],
        out_specs=pl.BlockSpec((1, C, HW), lambda b: (b, 0, 0)),
        compiler_params=pltpu.CompilerParams(dimension_semantics=("parallel",)),
    )(x, pool_t, up_t, w1t, b1c, w2t, b2c)

    return out.reshape(B, C, H, W)      # pure reshape, no transpose


def attention_block_ref(x_nchw, w1, b1, w2, b2, *, stride):
    """Pure-JAX reference (independent path via lax.reduce_window)."""
    B, C, H, W = x_nchw.shape
    k, pad = 2 * stride - 1, stride - 1
    x = jnp.transpose(x_nchw, (0, 2, 3, 1))
    dims, strides = (1, k, k, 1), (1, stride, stride, 1)
    padding = [(0, 0), (pad, pad), (pad, pad), (0, 0)]
    sums = jax.lax.reduce_window(x, 0.0, jax.lax.add, dims, strides, padding)
    cnts = jax.lax.reduce_window(jnp.ones((1, H, W, 1), x.dtype), 0.0,
                                 jax.lax.add, dims, strides, padding)
    pooled = sums / cnts
    h = jax.nn.relu(pooled @ w1 + b1)
    y = jax.nn.sigmoid(h @ w2 + b2)
    y_up = jnp.repeat(jnp.repeat(y, stride, axis=1), stride, axis=2)[:, :H, :W, :]
    return jnp.transpose(x * y_up, (0, 3, 1, 2))


if __name__ == "__main__":
    # Module config: n_feats=32, reduction=4, stride=4 (local SE pooling).
    B, C, H, W = 2, 32, 16, 16
    STRIDE, REDUCTION = 4, 4
    Cr = C // REDUCTION

    key = jax.random.PRNGKey(0)
    kx, k1, k2, k3, k4 = jax.random.split(key, 5)
    x = jax.random.normal(kx, (B, C, H, W), jnp.float32)
    # Synthetic params (torch Conv2d 1x1 weight (out,in,1,1) stored here as (in,out)).
    w1 = jax.random.normal(k1, (C, Cr), jnp.float32) * (1.0 / jnp.sqrt(C))
    b1 = jax.random.normal(k2, (Cr,), jnp.float32) * 0.1
    w2 = jax.random.normal(k3, (Cr, C), jnp.float32) * (1.0 / jnp.sqrt(Cr))
    b2 = jax.random.normal(k4, (C,), jnp.float32) * 0.1

    out = attention_block(x, w1, b1, w2, b2, stride=STRIDE)
    out = jax.block_until_ready(out)

    ref = attention_block_ref(x, w1, b1, w2, b2, stride=STRIDE)
    assert out.shape == x.shape
    assert jnp.allclose(out, ref, atol=1e-5, rtol=1e-5)

    print("KERNEL_OK")
</pallas_src>

<mosaic_0001>
module attributes {stable_mosaic.version = 11 : i64} {
  func.func @_attn_kernel(%arg0: i32, %arg1: memref<1x32x256xf32, #tpu.memory_space<vmem>>, %arg2: memref<256x16xf32, #tpu.memory_space<vmem>>, %arg3: memref<16x256xf32, #tpu.memory_space<vmem>>, %arg4: memref<8x32xf32, #tpu.memory_space<vmem>>, %arg5: memref<8x1xf32, #tpu.memory_space<vmem>>, %arg6: memref<32x8xf32, #tpu.memory_space<vmem>>, %arg7: memref<32x1xf32, #tpu.memory_space<vmem>>, %arg8: memref<1x32x256xf32, #tpu.memory_space<vmem>>) attributes {dimension_semantics = [#tpu.dimension_semantics<parallel>], iteration_bounds = array<i64: 2>, scalar_prefetch = 0 : i64, scratch_operands = 0 : i64, tpu.core_type = #tpu.core_type<tc>, window_params = [{transform_indices = @transform_0, window_bounds = array<i64: 1, 32, 256>}, {pipeline_mode = #tpu.pipeline_mode<synchronous>, transform_indices = @transform_1, window_bounds = array<i64: 256, 16>}, {pipeline_mode = #tpu.pipeline_mode<synchronous>, transform_indices = @transform_2, window_bounds = array<i64: 16, 256>}, {pipeline_mode = #tpu.pipeline_mode<synchronous>, transform_indices = @transform_3, window_bounds = array<i64: 8, 32>}, {pipeline_mode = #tpu.pipeline_mode<synchronous>, transform_indices = @transform_4, window_bounds = array<i64: 8, 1>}, {pipeline_mode = #tpu.pipeline_mode<synchronous>, transform_indices = @transform_5, window_bounds = array<i64: 32, 8>}, {pipeline_mode = #tpu.pipeline_mode<synchronous>, transform_indices = @transform_6, window_bounds = array<i64: 32, 1>}, {transform_indices = @transform_7, window_bounds = array<i64: 1, 32, 256>}]} {
    %c0 = arith.constant 0 : index
    %c0_0 = arith.constant 0 : index
    %c0_1 = arith.constant 0 : index
    %0 = vector.load %arg1[%c0, %c0_0, %c0_1] : memref<1x32x256xf32, #tpu.memory_space<vmem>>, vector<1x32x256xf32>
    %1 = vector.shape_cast %0 : vector<1x32x256xf32> to vector<32x256xf32>
    %c0_2 = arith.constant 0 : index
    %c0_3 = arith.constant 0 : index
    %2 = vector.load %arg2[%c0_2, %c0_3] : memref<256x16xf32, #tpu.memory_space<vmem>>, vector<256x16xf32>
    %cst = arith.constant dense<0.000000e+00> : vector<32x16xf32>
    %3 = tpu.matmul %1, %2, %cst {dimension_numbers = #tpu.dot_dimension_numbers<[1], [0], [0], [1], [0, 0, 1, 1], [], []>} : vector<32x256xf32>, vector<256x16xf32>, vector<32x16xf32> -> vector<32x16xf32>
    %c0_4 = arith.constant 0 : index
    %c0_5 = arith.constant 0 : index
    %4 = vector.load %arg4[%c0_4, %c0_5] : memref<8x32xf32, #tpu.memory_space<vmem>>, vector<8x32xf32>
    %cst_6 = arith.constant dense<0.000000e+00> : vector<8x16xf32>
    %5 = tpu.matmul %4, %3, %cst_6 {dimension_numbers = #tpu.dot_dimension_numbers<[1], [0], [0], [1], [0, 0, 1, 1], [], []>} : vector<8x32xf32>, vector<32x16xf32>, vector<8x16xf32> -> vector<8x16xf32>
    %c0_7 = arith.constant 0 : index
    %c0_8 = arith.constant 0 : index
    %6 = vector.load %arg5[%c0_7, %c0_8] : memref<8x1xf32, #tpu.memory_space<vmem>>, vector<8x1xf32>
    %7 = vector.broadcast %6 : vector<8x1xf32> to vector<8x16xf32>
    %8 = arith.addf %5, %7 : vector<8x16xf32>
    %cst_9 = arith.constant 0.000000e+00 : f32
    %9 = vector.broadcast %cst_9 : f32 to vector<8x16xf32>
    %10 = arith.maximumf %8, %9 : vector<8x16xf32>
    %c0_10 = arith.constant 0 : index
    %c0_11 = arith.constant 0 : index
    %11 = vector.load %arg6[%c0_10, %c0_11] : memref<32x8xf32, #tpu.memory_space<vmem>>, vector<32x8xf32>
    %cst_12 = arith.constant dense<0.000000e+00> : vector<32x16xf32>
    %12 = tpu.matmul %11, %10, %cst_12 {dimension_numbers = #tpu.dot_dimension_numbers<[1], [0], [0], [1], [0, 0, 1, 1], [], []>} : vector<32x8xf32>, vector<8x16xf32>, vector<32x16xf32> -> vector<32x16xf32>
    %c0_13 = arith.constant 0 : index
    %c0_14 = arith.constant 0 : index
    %13 = vector.load %arg7[%c0_13, %c0_14] : memref<32x1xf32, #tpu.memory_space<vmem>>, vector<32x1xf32>
    %14 = vector.broadcast %13 : vector<32x1xf32> to vector<32x16xf32>
    %15 = arith.addf %12, %14 : vector<32x16xf32>
    %16 = arith.negf %15 : vector<32x16xf32>
    %17 = math.exp %16 : vector<32x16xf32>
    %cst_15 = arith.constant 1.000000e+00 : f32
    %18 = vector.broadcast %cst_15 : f32 to vector<32x16xf32>
    %19 = arith.addf %18, %17 : vector<32x16xf32>
    %20 = arith.divf %18, %19 : vector<32x16xf32>
    %c0_16 = arith.constant 0 : index
    %c0_17 = arith.constant 0 : index
    %21 = vector.load %arg3[%c0_16, %c0_17] : memref<16x256xf32, #tpu.memory_space<vmem>>, vector<16x256xf32>
    %cst_18 = arith.constant dense<0.000000e+00> : vector<32x256xf32>
    %22 = tpu.matmul %20, %21, %cst_18 {dimension_numbers = #tpu.dot_dimension_numbers<[1], [0], [0], [1], [0, 0, 1, 1], [], []>} : vector<32x16xf32>, vector<16x256xf32>, vector<32x256xf32> -> vector<32x256xf32>
    %23 = arith.mulf %1, %22 : vector<32x256xf32>
    %c0_19 = arith.constant 0 : index
    %c0_20 = arith.constant 0 : index
    %c0_21 = arith.constant 0 : index
    %24 = vector.load %arg8[%c0_19, %c0_20, %c0_21] : memref<1x32x256xf32, #tpu.memory_space<vmem>>, vector<1x32x256xf32>
    %25 = vector.shape_cast %24 : vector<1x32x256xf32> to vector<32x256xf32>
    %26 = vector.shape_cast %23 : vector<32x256xf32> to vector<1x32x256xf32>
    tpu.vector_store %arg8[%c0_19, %c0_20, %c0_21], %26 {strides = array<i32>} : memref<1x32x256xf32, #tpu.memory_space<vmem>>, vector<1x32x256xf32>,
    return
  }
  func.func @transform_0(%arg0: i32) -> (i32, i32, i32) {
    %c0_i32 = arith.constant 0 : i32
    %c0_i32_0 = arith.constant 0 : i32
    %c0_i32_1 = arith.constant 0 : i32
    return %arg0, %c0_i32, %c0_i32_0 : i32, i32, i32
  }
  func.func @transform_1(%arg0: i32) -> (i32, i32) {
    %c0_i32 = arith.constant 0 : i32
    %c0_i32_0 = arith.constant 0 : i32
    %c0_i32_1 = arith.constant 0 : i32
    return %c0_i32, %c0_i32_0 : i32, i32
  }
  func.func @transform_2(%arg0: i32) -> (i32, i32) {
    %c0_i32 = arith.constant 0 : i32
    %c0_i32_0 = arith.constant 0 : i32
    %c0_i32_1 = arith.constant 0 : i32
    return %c0_i32, %c0_i32_0 : i32, i32
  }
  func.func @transform_3(%arg0: i32) -> (i32, i32) {
    %c0_i32 = arith.constant 0 : i32
    %c0_i32_0 = arith.constant 0 : i32
    %c0_i32_1 = arith.constant 0 : i32
    return %c0_i32, %c0_i32_0 : i32, i32
  }
  func.func @transform_4(%arg0: i32) -> (i32, i32) {
    %c0_i32 = arith.constant 0 : i32
    %c0_i32_0 = arith.constant 0 : i32
    %c0_i32_1 = arith.constant 0 : i32
    return %c0_i32, %c0_i32_0 : i32, i32
  }
  func.func @transform_5(%arg0: i32) -> (i32, i32) {
    %c0_i32 = arith.constant 0 : i32
    %c0_i32_0 = arith.constant 0 : i32
    %c0_i32_1 = arith.constant 0 : i32
    return %c0_i32, %c0_i32_0 : i32, i32
  }
  func.func @transform_6(%arg0: i32) -> (i32, i32) {
    %c0_i32 = arith.constant 0 : i32
    %c0_i32_0 = arith.constant 0 : i32
    %c0_i32_1 = arith.constant 0 : i32
    return %c0_i32, %c0_i32_0 : i32, i32
  }
  func.func @transform_7(%arg0: i32) -> (i32, i32, i32) {
    %c0_i32 = arith.constant 0 : i32
    %c0_i32_0 = arith.constant 0 : i32
    %c0_i32_1 = arith.constant 0 : i32
    return %arg0, %c0_i32, %c0_i32_0 : i32, i32, i32
  }
}

</mosaic_0001>

<llo_original>
// kernel: tpu_custom_call.1
$region0: #{tpu_custom_call.1}
  #allocation0 [shape = 'u32[]', space=smem, size = 0x4, offset = 0x4, fixed_abs, tag = 'smem constant byte address 0x4 - core index']
  #allocation1 [shape = 'u32[144,128]{1,0:T(1,128)}', space=vmem, size = 0x12000, scoped, tag = 'internal scratch']
  %s0 = inlined_call_operand.vmem [shape: f32[2,32,256], index: 0, kind: input, shape index: {}]
  %s1 = inlined_call_operand.vmem [shape: f32[256,16], index: 1, kind: input, shape index: {}]
  %s2 = inlined_call_operand.vmem [shape: f32[16,256], index: 2, kind: input, shape index: {}]
  %s3 = inlined_call_operand.vmem [shape: f32[8,32], index: 3, kind: input, shape index: {}]
  %s4 = inlined_call_operand.vmem [shape: f32[8,1], index: 4, kind: input, shape index: {}]
  %s5 = inlined_call_operand.vmem [shape: f32[32,8], index: 5, kind: input, shape index: {}]
  %s6 = inlined_call_operand.vmem [shape: f32[32,1], index: 6, kind: input, shape index: {}]
  %s7 = inlined_call_operand.hbm [shape: f32[2,32,256], index: 7, kind: output, shape index: {}]
  %s8 = sld [smem:[#allocation0]]
  $region61: #{tpu_custom_call.1} parent=0
    _
  %s10 = ssub.s32 1, %s8
  %s11 = scalar_select 0, %s10, %s8
  $region1: #{tpu_custom_call.1} parent=0
    #allocation2 [shape = 'u8[65536]{0}', space=vmem, size = 0x10000, scoped, tag = 'output window, operand 0']
    #allocation3 [shape = 's32[2]{0}', space=sflag, size = 0x8, scoped, tag = 'scoped memory for tpu_custom_call.1']
    %12 = vsyncpa [#allocation3], 0
    %s13 = scalar_lea.sflag [#allocation3], 1
    %14 = vsyncpa %s13, 0
    loop: start=0, step=1, limit=4
    $region2: #{tpu_custom_call.1} parent=1 // loop_pre_header
      _
    $region3: #{tpu_custom_call.1} parent=1 // loop_header
      %s16 = sphi 0, %s20
      %p17 = scmp.ge.s32.totalorder %s16, 4
      %s26 = sphi 0, %s28
      %s29 = sphi 0, %s26
      %s30 = sphi 0, %s29
      %s46 = sphi 0, %s30
      %s50 = sphi 0, %s50
      %s52 = sphi 0, %s50
      %s53 = sphi 0, %s52
      %s67 = sphi 0, %s53
      %s71 = sphi 0, %s71
      %s73 = sphi 0, %s71
      %s74 = sphi 0, %s73
      %s88 = sphi 0, %s74
      %s92 = sphi 0, %s92
      %s94 = sphi 0, %s92
      %s95 = sphi 0, %s94
      %s109 = sphi 0, %s95
      %s113 = sphi 0, %s113
      %s115 = sphi 0, %s113
      %s116 = sphi 0, %s115
      %s130 = sphi 0, %s116
      %s134 = sphi 0, %s134
      %s136 = sphi 0, %s134
      %s137 = sphi 0, %s136
      %s151 = sphi 0, %s137
      %s155 = sphi 0, %s155
      %s157 = sphi 0, %s155
      %s158 = sphi 0, %s157
      %s172 = sphi 0, %s158
      %s178 = sphi 0, %s180
      %s181 = sphi 0, %s178
      %s182 = sphi 0, %s181
      %s198 = sphi 0, %s182
    $region4: #{tpu_custom_call.1} parent=1 // loop_header_branch
      %19 = sbr.rel (%p17) target = $region8
    $region5: #{tpu_custom_call.1} parent=1 // loop_body
      %s21 = ssub.s32 %s16, 1
      %s22 = ssub.s32 %s16, 2
      %s23 = sadd.s32 %s16, 1
      %s24 = ssub.s32 %s16, %s23
      %p25 = scmp.eq.s32.totalorder %s24, 0
      %s27 = sadd.s32 %s26, 1
      %s28 = scalar_select %p25, %s26, %s27
      %p31 = pneg %p25
      %p32 = scmp.eq.s32.totalorder %s16, 1
      %p33 = por %p31, %p32
      %p34 = scmp.ne.s32.totalorder %s26, %s29
      %p35 = scmp.eq.s32.totalorder %s16, 0
      %p36 = por %p34, %p35
      %p37 = scmp.ne.s32.totalorder %s26, %s29
      %p38 = scmp.eq.s32.totalorder %s21, 1
      %p39 = por %p37, %p38
      %p40 = scmp.ne.s32.totalorder %s29, %s30
      %p41 = scmp.eq.s32.totalorder %s21, 0
      %p42 = por %p40, %p41
      %p43 = scmp.ne.s32.totalorder %s29, %s30
      %p44 = scmp.eq.s32.totalorder %s22, 1
      %p45 = por %p43, %p44
      %p47 = scmp.ne.s32.totalorder %s30, %s46
      %p48 = scmp.eq.s32.totalorder %s22, 0
      %p49 = por %p47, %p48
      %s51 = sadd.s32 %s50, 1
      %p54 = scmp.eq.s32.totalorder %s16, 1
      %p55 = scmp.ne.s32.totalorder %s50, %s52
      %p56 = scmp.eq.s32.totalorder %s16, 0
      %p57 = por %p55, %p56
      %p58 = scmp.ne.s32.totalorder %s50, %s52
      %p59 = scmp.eq.s32.totalorder %s21, 1
      %p60 = por %p58, %p59
      %p61 = scmp.ne.s32.totalorder %s52, %s53
      %p62 = scmp.eq.s32.totalorder %s21, 0
      %p63 = por %p61, %p62
      %p64 = scmp.ne.s32.totalorder %s52, %s53
      %p65 = scmp.eq.s32.totalorder %s22, 1
      %p66 = por %p64, %p65
      %p68 = scmp.ne.s32.totalorder %s53, %s67
      %p69 = scmp.eq.s32.totalorder %s22, 0
      %p70 = por %p68, %p69
      %s72 = sadd.s32 %s71, 1
      %p75 = scmp.eq.s32.totalorder %s16, 1
      %p76 = scmp.ne.s32.totalorder %s71, %s73
      %p77 = scmp.eq.s32.totalorder %s16, 0
      %p78 = por %p76, %p77
      %p79 = scmp.ne.s32.totalorder %s71, %s73
      %p80 = scmp.eq.s32.totalorder %s21, 1
      %p81 = por %p79, %p80
      %p82 = scmp.ne.s32.totalorder %s73, %s74
      %p83 = scmp.eq.s32.totalorder %s21, 0
      %p84 = por %p82, %p83
      %p85 = scmp.ne.s32.totalorder %s73, %s74
      %p86 = scmp.eq.s32.totalorder %s22, 1
      %p87 = por %p85, %p86
      %p89 = scmp.ne.s32.totalorder %s74, %s88
      %p90 = scmp.eq.s32.totalorder %s22, 0
      %p91 = por %p89, %p90
      %s93 = sadd.s32 %s92, 1
      %p96 = scmp.eq.s32.totalorder %s16, 1
      %p97 = scmp.ne.s32.totalorder %s92, %s94
      %p98 = scmp.eq.s32.totalorder %s16, 0
      %p99 = por %p97, %p98
      %p100 = scmp.ne.s32.totalorder %s92, %s94
      %p101 = scmp.eq.s32.totalorder %s21, 1
      %p102 = por %p100, %p101
      %p103 = scmp.ne.s32.totalorder %s94, %s95
      %p104 = scmp.eq.s32.totalorder %s21, 0
      %p105 = por %p103, %p104
      %p106 = scmp.ne.s32.totalorder %s94, %s95
      %p107 = scmp.eq.s32.totalorder %s22, 1
      %p108 = por %p106, %p107
      %p110 = scmp.ne.s32.totalorder %s95, %s109
      %p111 = scmp.eq.s32.totalorder %s22, 0
      %p112 = por %p110, %p111
      %s114 = sadd.s32 %s113, 1
      %p117 = scmp.eq.s32.totalorder %s16, 1
      %p118 = scmp.ne.s32.totalorder %s113, %s115
      %p119 = scmp.eq.s32.totalorder %s16, 0
      %p120 = por %p118, %p119
      %p121 = scmp.ne.s32.totalorder %s113, %s115
      %p122 = scmp.eq.s32.totalorder %s21, 1
      %p123 = por %p121, %p122
      %p124 = scmp.ne.s32.totalorder %s115, %s116
      %p125 = scmp.eq.s32.totalorder %s21, 0
      %p126 = por %p124, %p125
      %p127 = scmp.ne.s32.totalorder %s115, %s116
      %p128 = scmp.eq.s32.totalorder %s22, 1
      %p129 = por %p127, %p128
      %p131 = scmp.ne.s32.totalorder %s116, %s130
      %p132 = scmp.eq.s32.totalorder %s22, 0
      %p133 = por %p131, %p132
      %s135 = sadd.s32 %s134, 1
      %p138 = scmp.eq.s32.totalorder %s16, 1
      %p139 = scmp.ne.s32.totalorder %s134, %s136
      %p140 = scmp.eq.s32.totalorder %s16, 0
      %p141 = por %p139, %p140
      %p142 = scmp.ne.s32.totalorder %s134, %s136
      %p143 = scmp.eq.s32.totalorder %s21, 1
      %p144 = por %p142, %p143
      %p145 = scmp.ne.s32.totalorder %s136, %s137
      %p146 = scmp.eq.s32.totalorder %s21, 0
      %p147 = por %p145, %p146
      %p148 = scmp.ne.s32.totalorder %s136, %s137
      %p149 = scmp.eq.s32.totalorder %s22, 1
      %p150 = por %p148, %p149
      %p152 = scmp.ne.s32.totalorder %s137, %s151
      %p153 = scmp.eq.s32.totalorder %s22, 0
      %p154 = por %p152, %p153
      %s156 = sadd.s32 %s155, 1
      %p159 = scmp.eq.s32.totalorder %s16, 1
      %p160 = scmp.ne.s32.totalorder %s155, %s157
      %p161 = scmp.eq.s32.totalorder %s16, 0
      %p162 = por %p160, %p161
      %p163 = scmp.ne.s32.totalorder %s155, %s157
      %p164 = scmp.eq.s32.totalorder %s21, 1
      %p165 = por %p163, %p164
      %p166 = scmp.ne.s32.totalorder %s157, %s158
      %p167 = scmp.eq.s32.totalorder %s21, 0
      %p168 = por %p166, %p167
      %p169 = scmp.ne.s32.totalorder %s157, %s158
      %p170 = scmp.eq.s32.totalorder %s22, 1
      %p171 = por %p169, %p170
      %p173 = scmp.ne.s32.totalorder %s158, %s172
      %p174 = scmp.eq.s32.totalorder %s22, 0
      %p175 = por %p173, %p174
      %s176 = ssub.s32 %s16, %s23
      %p177 = scmp.eq.s32.totalorder %s176, 0
      %s179 = sadd.s32 %s178, 1
      %s180 = scalar_select %p177, %s178, %s179
      %p183 = pneg %p177
      %p184 = scmp.eq.s32.totalorder %s16, 1
      %p185 = por %p183, %p184
      %p186 = scmp.ne.s32.totalorder %s178, %s181
      %p187 = scmp.eq.s32.totalorder %s16, 0
      %p188 = por %p186, %p187
      %p189 = scmp.ne.s32.totalorder %s178, %s181
      %p190 = scmp.eq.s32.totalorder %s21, 1
      %p191 = por %p189, %p190
      %p192 = scmp.ne.s32.totalorder %s181, %s182
      %p193 = scmp.eq.s32.totalorder %s21, 0
      %p194 = por %p192, %p193
      %p195 = scmp.ne.s32.totalorder %s181, %s182
      %p196 = scmp.eq.s32.totalorder %s22, 1
      %p197 = por %p195, %p196
      %p199 = scmp.ne.s32.totalorder %s182, %s198
      %p200 = scmp.eq.s32.totalorder %s22, 0
      %p201 = por %p199, %p200
      %p202 = scmp.le.s32.totalorder 1, %s16
      %p203 = scmp.lt.s32.totalorder %s16, 3
      %p204 = pnand %p202, %p203
      %p205 = pneg %p204
      // Predicated region
      $region9: #{tpu_custom_call.1} parent=5 // pred_check
        _
      $region10: #{tpu_custom_call.1} parent=5 // pred_check_branch
        %207 = sbr.rel (%p204) target = $region12
      $region11: #{tpu_custom_call.1} parent=5 // pred_region
        %s208 = ssub.s32 %s16, 1
        // Predicated region
        $region13: #{tpu_custom_call.1} parent=11 // pred_check
          %p209 = pneg %p63
        $region14: #{tpu_custom_call.1} parent=11 // pred_check_branch
          %211 = sbr.rel (%p209) target = $region16
        $region15: #{tpu_custom_call.1} parent=11 // pred_region
          _
        $region16: #{tpu_custom_call.1} parent=11 // pred_fallthru
          _
        // Predicated region
        $region17: #{tpu_custom_call.1} parent=11 // pred_check
          %p212 = pneg %p84
        $region18: #{tpu_custom_call.1} parent=11 // pred_check_branch
          %214 = sbr.rel (%p212) target = $region20
        $region19: #{tpu_custom_call.1} parent=11 // pred_region
          _
        $region20: #{tpu_custom_call.1} parent=11 // pred_fallthru
          _
        // Predicated region
        $region21: #{tpu_custom_call.1} parent=11 // pred_check
          %p215 = pneg %p105
        $region22: #{tpu_custom_call.1} parent=11 // pred_check_branch
          %217 = sbr.rel (%p215) target = $region24
        $region23: #{tpu_custom_call.1} parent=11 // pred_region
          _
        $region24: #{tpu_custom_call.1} parent=11 // pred_fallthru
          _
        // Predicated region
        $region25: #{tpu_custom_call.1} parent=11 // pred_check
          %p218 = pneg %p126
        $region26: #{tpu_custom_call.1} parent=11 // pred_check_branch
          %220 = sbr.rel (%p218) target = $region28
        $region27: #{tpu_custom_call.1} parent=11 // pred_region
          _
        $region28: #{tpu_custom_call.1} parent=11 // pred_fallthru
          _
        // Predicated region
        $region29: #{tpu_custom_call.1} parent=11 // pred_check
          %p221 = pneg %p147
        $region30: #{tpu_custom_call.1} parent=11 // pred_check_branch
          %223 = sbr.rel (%p221) target = $region32
        $region31: #{tpu_custom_call.1} parent=11 // pred_region
          _
        $region32: #{tpu_custom_call.1} parent=11 // pred_fallthru
          _
        // Predicated region
        $region33: #{tpu_custom_call.1} parent=11 // pred_check
          %p224 = pneg %p168
        $region34: #{tpu_custom_call.1} parent=11 // pred_check_branch
          %226 = sbr.rel (%p224) target = $region36
        $region35: #{tpu_custom_call.1} parent=11 // pred_region
          _
        $region36: #{tpu_custom_call.1} parent=11 // pred_fallthru
          _
      $region12: #{tpu_custom_call.1} parent=5 // pred_fallthru
        _
      %p227 = scmp.lt.s32.totalorder %s16, 2
      // Predicated region
      $region37: #{tpu_custom_call.1} parent=5 // pred_check
        %p228 = pneg %p227
      $region38: #{tpu_custom_call.1} parent=5 // pred_check_branch
        %230 = sbr.rel (%p228) target = $region40
      $region39: #{tpu_custom_call.1} parent=5 // pred_region
        // Predicated region
        $region41: #{tpu_custom_call.1} parent=39 // pred_check
          %p231 = pneg %p36
        $region42: #{tpu_custom_call.1} parent=39 // pred_check_branch
          %233 = sbr.rel (%p231) target = $region44
        $region43: #{tpu_custom_call.1} parent=39 // pred_region
          %p234 = scmp.lt.s32.totalorder %s16, 1
          %s235 = scalar_select %p234, %s16, 1
          %s236 = smul.addr %s235, 8
          %s237 = smul.addr %s236, 8
          %s238 = scalar_lea.vmem %s0, %s237
        $region44: #{tpu_custom_call.1} parent=39 // pred_fallthru
          _
      $region40: #{tpu_custom_call.1} parent=5 // pred_fallthru
        _
      %p239 = scmp.le.s32.totalorder 1, %s16
      %p240 = scmp.lt.s32.totalorder %s16, 3
      %p241 = pnand %p239, %p240
      %p242 = pneg %p241
      // Predicated region
      $region45: #{tpu_custom_call.1} parent=5 // pred_check
        _
      $region46: #{tpu_custom_call.1} parent=5 // pred_check_branch
        %244 = sbr.rel (%p241) target = $region48
      $region47: #{tpu_custom_call.1} parent=5 // pred_region
        %s245 = ssub.s32 %s16, 1
        %p246 = scmp.lt.s32.totalorder %s21, 1
        %s247 = scalar_select %p246, %s21, 1
        %s248 = smul.addr %s247, 8
        %s249 = smul.addr %s248, 8
        %s250 = scalar_lea.vmem %s0, %s249
        %p251 = pneg %p42
        %p252 = pneg %p39
        %p253 = pneg %p63
        %p254 = pneg %p60
        %p255 = pneg %p84
        %p256 = pneg %p81
        %p257 = pneg %p105
        %p258 = pneg %p102
        %p259 = pneg %p126
        %p260 = pneg %p123
        %p261 = pneg %p147
        %p262 = pneg %p144
        %p263 = pneg %p168
        %p264 = pneg %p165
        %p265 = pneg %p194
        %p266 = pneg %p191
        %s267 = sand.u32 %s181, 1
        %s268 = scalar_lea.sflag [#allocation3], %s267
        %s269 = sand.u32 %s181, 1
        %s270 = smul.addr %s269, 64
        %s271 = scalar_lea.vmem [#allocation2], %s270
        %p272 = scmp.lt.s32.totalorder %s21, 1
        %s273 = scalar_select %p272, %s21, 1
        %s274 = smul.addr %s273, 8
        %s275 = smul.addr %s274, 8
        %s276 = scalar_lea.vmem %s0, %s275
        %v277 = vld [vmem:[%s276] sm:$0xff]
        %v278 = vld [vmem:[%s276 + $0x8] sm:$0xff]
        %v279 = vld [vmem:[%s276 + $0x10] sm:$0xff]
        %v280 = vld [vmem:[%s276 + $0x18] sm:$0xff]
        %v281 = vld [vmem:[%s276 + $0x20] sm:$0xff]
        %v282 = vld [vmem:[%s276 + $0x28] sm:$0xff]
        %v283 = vld [vmem:[%s276 + $0x30] sm:$0xff]
        %v284 = vld [vmem:[%s276 + $0x38] sm:$0xff]
        %v285 = vld [vmem:[%s1] sm:$0xff]
        %v286 = vld [vmem:[%s1 + $0x8] sm:$0xff]
        %v287 = vld [vmem:[%s1 + $0x10] sm:$0xff]
        %v288 = vld [vmem:[%s1 + $0x18] sm:$0xff]
        %v289 = vld [vmem:[%s1 + $0x20] sm:$0xff]
        %v290 = vld [vmem:[%s1 + $0x28] sm:$0xff]
        %v291 = vld [vmem:[%s1 + $0x30] sm:$0xff]
        %v292 = vld [vmem:[%s1 + $0x38] sm:$0xff]
        %v293 = vld [vmem:[%s1 + $0x40] sm:$0xff]
        %v294 = vld [vmem:[%s1 + $0x48] sm:$0xff]
        %v295 = vld [vmem:[%s1 + $0x50] sm:$0xff]
        %v296 = vld [vmem:[%s1 + $0x58] sm:$0xff]
        %v297 = vld [vmem:[%s1 + $0x60] sm:$0xff]
        %v298 = vld [vmem:[%s1 + $0x68] sm:$0xff]
        %v299 = vld [vmem:[%s1 + $0x70] sm:$0xff]
        %v300 = vld [vmem:[%s1 + $0x78] sm:$0xff]
        %v301 = vld [vmem:[%s1 + $0x80] sm:$0xff]
        %v302 = vld [vmem:[%s1 + $0x88] sm:$0xff]
        %v303 = vld [vmem:[%s1 + $0x90] sm:$0xff]
        %v304 = vld [vmem:[%s1 + $0x98] sm:$0xff]
        %v305 = vld [vmem:[%s1 + $0xa0] sm:$0xff]
        %v306 = vld [vmem:[%s1 + $0xa8] sm:$0xff]
        %v307 = vld [vmem:[%s1 + $0xb0] sm:$0xff]
        %v308 = vld [vmem:[%s1 + $0xb8] sm:$0xff]
        %v309 = vld [vmem:[%s1 + $0xc0] sm:$0xff]
        %v310 = vld [vmem:[%s1 + $0xc8] sm:$0xff]
        %v311 = vld [vmem:[%s1 + $0xd0] sm:$0xff]
        %v312 = vld [vmem:[%s1 + $0xd8] sm:$0xff]
        %v313 = vld [vmem:[%s1 + $0xe0] sm:$0xff]
        %v314 = vld [vmem:[%s1 + $0xe8] sm:$0xff]
        %v315 = vld [vmem:[%s1 + $0xf0] sm:$0xff]
        %v316 = vld [vmem:[%s1 + $0xf8] sm:$0xff]
        %317 = vmatprep.subr.mxu0 0.0
        %318 = vmatpush1.msra.mxu0 %v285
        %319 = vmatprep.subr.mxu0 0.0
        %320 = vmatpush1.msra.mxu0 %v286
        %321 = vmatprep.subr.mxu0 0.0
        %322 = vmatpush1.msra.mxu0 %v287
        %323 = vmatprep.subr.mxu0 0.0
        %324 = vmatpush1.msra.mxu0 %v288
        %325 = vmatprep.subr.mxu0 0.0
        %326 = vmatpush1.msra.mxu0 %v289
        %327 = vmatprep.subr.mxu0 0.0
        %328 = vmatpush1.msra.mxu0 %v290
        %329 = vmatprep.subr.mxu0 0.0
        %330 = vmatpush1.msra.mxu0 %v291
        %331 = vmatprep.subr.mxu0 0.0
        %332 = vmatpush1.msra.mxu0 %v292
        %333 = vmatprep.subr.mxu0 0.0
        %334 = vmatpush1.msra.mxu0 %v293
        %335 = vmatprep.subr.mxu0 0.0
        %336 = vmatpush1.msra.mxu0 %v294
        %337 = vmatprep.subr.mxu0 0.0
        %338 = vmatpush1.msra.mxu0 %v295
        %339 = vmatprep.subr.mxu0 0.0
        %340 = vmatpush1.msra.mxu0 %v296
        %341 = vmatprep.subr.mxu0 0.0
        %342 = vmatpush1.msra.mxu0 %v297
        %343 = vmatprep.subr.mxu0 0.0
        %344 = vmatpush1.msra.mxu0 %v298
        %345 = vmatprep.subr.mxu0 0.0
        %346 = vmatpush1.msra.mxu0 %v299
        %347 = vmatprep.subr.mxu0 0.0
        %348 = vmatpush1.msra.mxu0 %v300
        %349 = vmatprep.subr.mxu0 0.0
        %350 = vmatpush1.msra.mxu0 %v301
        %351 = vmatprep.subr.mxu0 0.0
        %352 = vmatpush1.msra.mxu0 %v302
        %353 = vmatprep.subr.mxu0 0.0
        %354 = vmatpush1.msra.mxu0 %v303
        %355 = vmatprep.subr.mxu0 0.0
        %356 = vmatpush1.msra.mxu0 %v304
        %357 = vmatprep.subr.mxu0 0.0
        %358 = vmatpush1.msra.mxu0 %v305
        %359 = vmatprep.subr.mxu0 0.0
        %360 = vmatpush1.msra.mxu0 %v306
        %361 = vmatprep.subr.mxu0 0.0
        %362 = vmatpush1.msra.mxu0 %v307
        %363 = vmatprep.subr.mxu0 0.0
        %364 = vmatpush1.msra.mxu0 %v308
        %365 = vmatprep.subr.mxu0 0.0
        %366 = vmatpush1.msra.mxu0 %v309
        %367 = vmatprep.subr.mxu0 0.0
        %368 = vmatpush1.msra.mxu0 %v310
        %369 = vmatprep.subr.mxu0 0.0
        %370 = vmatpush1.msra.mxu0 %v311
        %371 = vmatprep.subr.mxu0 0.0
        %372 = vmatpush1.msra.mxu0 %v312
        %373 = vmatprep.subr.mxu0 0.0
        %374 = vmatpush1.msra.mxu0 %v313
        %375 = vmatprep.subr.mxu0 0.0
        %376 = vmatpush1.msra.mxu0 %v314
        %377 = vmatprep.subr.mxu0 0.0
        %378 = vmatpush1.msra.mxu0 %v315
        %379 = vmatprep.subr.mxu0 0.0
        %380 = vmatpush1.msra.mxu0 %v316
        %381 = vmatprep.mubr.f32.mxu0 %v278
        %382 = vmatmul.mubr.f32.gmra.mrb[0].mxu0 %v277
        %v383 = vpop.f32.mrb[0].mxu0
        %v384 = vadd.f32 0.0, %v383
        %v385 = vpop.f32.mrb[0].mxu0
        %386 = vmatprep.mubr.f32.mxu0 %v280
        %387 = vmatmul.mubr.f32.gmra.mrb[0].mxu0 %v279
        %v388 = vpop.f32.mrb[0].mxu0
        %v389 = vadd.f32 0.0, %v388
        %v390 = vpop.f32.mrb[0].mxu0
        %391 = vmatprep.mubr.f32.mxu0 %v282
        %392 = vmatmul.mubr.f32.gmra.mrb[0].mxu0 %v281
        %v393 = vpop.f32.mrb[0].mxu0
        %v394 = vadd.f32 0.0, %v393
        %v395 = vpop.f32.mrb[0].mxu0
        %396 = vmatprep.mubr.f32.mxu0 %v284
        %397 = vmatmul.mubr.f32.gmra.mrb[0].mxu0 %v283
        %v398 = vpop.f32.mrb[0].mxu0
        %v399 = vadd.f32 0.0, %v398
        %v400 = vpop.f32.mrb[0].mxu0
        %401 = vdwg.mxu0
        %v402 = vld [vmem:[%s3] sm:$0xff]
        %v403 = vld [vmem:[%s4] sm:$0xff]
        %405 = vset.pattern.permute.xlu0 0
        %406 = vperm.xlu0 %405, %v403
        %v407 = vpop.permute.xlu0 %406
        %vm409 = vcmask 261120
        %v411 = vsel %vm409, %v402, 0
        %413 = vmatprep.subr.mxu0 0.0
        %414 = vmatpush1.msra.mxu0 %v384
        %415 = vmatprep.subr.mxu0 0.0
        %416 = vmatpush1.msra.mxu0 %v389
        %417 = vmatprep.subr.mxu0 0.0
        %418 = vmatpush1.msra.mxu0 %v394
        %419 = vmatprep.subr.mxu0 0.0
        %420 = vmatpush1.msra.mxu0 %v399
        %421 = vmatprep.subr.mxu0 0.0
        %422 = vmatpush1.msra.mxu0 0.0
        %423 = vmatprep.subr.mxu0 0.0
        %424 = vmatpush1.msra.mxu0 0.0
        %425 = vmatprep.subr.mxu0 0.0
        %426 = vmatpush1.msra.mxu0 0.0
        %427 = vmatprep.subr.mxu0 0.0
        %428 = vmatpush1.msra.mxu0 0.0
        %429 = vmatprep.subr.mxu0 0.0
        %430 = vmatpush1.msra.mxu0 0.0
        %431 = vmatprep.subr.mxu0 0.0
        %432 = vmatpush1.msra.mxu0 0.0
        %433 = vmatprep.subr.mxu0 0.0
        %434 = vmatpush1.msra.mxu0 0.0
        %435 = vmatprep.subr.mxu0 0.0
        %436 = vmatpush1.msra.mxu0 0.0
        %437 = vmatprep.subr.mxu0 0.0
        %438 = vmatpush1.msra.mxu0 0.0
        %439 = vmatprep.subr.mxu0 0.0
        %440 = vmatpush1.msra.mxu0 0.0
        %441 = vmatprep.subr.mxu0 0.0
        %442 = vmatpush1.msra.mxu0 0.0
        %443 = vmatprep.subr.mxu0 0.0
        %444 = vmatpush1.msra.mxu0 0.0
        %445 = vmatprep.subr.mxu0 0.0
        %446 = vmatpush1.msra.mxu0 0.0
        %447 = vmatprep.subr.mxu0 0.0
        %448 = vmatpush1.msra.mxu0 0.0
        %449 = vmatprep.subr.mxu0 0.0
        %450 = vmatpush1.msra.mxu0 0.0
        %451 = vmatprep.subr.mxu0 0.0
        %452 = vmatpush1.msra.mxu0 0.0
        %453 = vmatprep.subr.mxu0 0.0
        %454 = vmatpush1.msra.mxu0 0.0
        %455 = vmatprep.subr.mxu0 0.0
        %456 = vmatpush1.msra.mxu0 0.0
        %457 = vmatprep.subr.mxu0 0.0
        %458 = vmatpush1.msra.mxu0 0.0
        %459 = vmatprep.subr.mxu0 0.0
        %460 = vmatpush1.msra.mxu0 0.0
        %461 = vmatprep.subr.mxu0 0.0
        %462 = vmatpush1.msra.mxu0 0.0
        %463 = vmatprep.subr.mxu0 0.0
        %464 = vmatpush1.msra.mxu0 0.0
        %465 = vmatprep.subr.mxu0 0.0
        %466 = vmatpush1.msra.mxu0 0.0
        %467 = vmatprep.subr.mxu0 0.0
        %468 = vmatpush1.msra.mxu0 0.0
        %469 = vmatprep.subr.mxu0 0.0
        %470 = vmatpush1.msra.mxu0 0.0
        %471 = vmatprep.subr.mxu0 0.0
        %472 = vmatpush1.msra.mxu0 0.0
        %473 = vmatprep.subr.mxu0 0.0
        %474 = vmatpush1.msra.mxu0 0.0
        %475 = vmatprep.subr.mxu0 0.0
        %476 = vmatpush1.msra.mxu0 0.0
        %477 = vmatprep.mubr.f32.mxu0 0.0
        %478 = vmatmul.mubr.f32.gmra.mrb[0].mxu0 %v411
        %v479 = vpop.f32.mrb[0].mxu0
        %v480 = vadd.f32 %v407, %v479
        %v481 = vpop.f32.mrb[0].mxu0
        %482 = vdwg.mxu0
        %v483 = vmax.f32 %v480, 0.0
        %v484 = vld [vmem:[%s5] sm:$0xff]
        %v485 = vld [vmem:[%s5 + $0x8] sm:$0xff]
        %v486 = vld [vmem:[%s5 + $0x10] sm:$0xff]
        %v487 = vld [vmem:[%s5 + $0x18] sm:$0xff]
        %v488 = vld [vmem:[%s6] sm:$0xff]
        %v489 = vld [vmem:[%s6 + $0x8] sm:$0xff]
        %v490 = vld [vmem:[%s6 + $0x10] sm:$0xff]
        %v491 = vld [vmem:[%s6 + $0x18] sm:$0xff]
        %493 = vset.pattern.permute.xlu0 0
        %494 = vperm.xlu0 %493, %v488
        %v495 = vpop.permute.xlu0 %494
        %498 = vset.pattern.permute.xlu0 0
        %499 = vperm.xlu0 %498, %v489
        %v500 = vpop.permute.xlu0 %499
        %503 = vset.pattern.permute.xlu0 0
        %504 = vperm.xlu0 %503, %v490
        %v505 = vpop.permute.xlu0 %504
        %508 = vset.pattern.permute.xlu0 0
        %509 = vperm.xlu0 %508, %v491
        %v510 = vpop.permute.xlu0 %509
        %vm512 = vcmask 64512
        %v514 = vsel %vm512, %v484, 0
        %v517 = vsel %vm512, %v485, 0
        %v520 = vsel %vm512, %v486, 0
        %v523 = vsel %vm512, %v487, 0
        %525 = vmatprep.subr.mxu0 0.0
        %526 = vmatpush1.msra.mxu0 %v483
        %527 = vmatprep.subr.mxu0 0.0
        %528 = vmatpush1.msra.mxu0 0.0
        %529 = vmatprep.subr.mxu0 0.0
        %530 = vmatpush1.msra.mxu0 0.0
        %531 = vmatprep.subr.mxu0 0.0
        %532 = vmatpush1.msra.mxu0 0.0
        %533 = vmatprep.subr.mxu0 0.0
        %534 = vmatpush1.msra.mxu0 0.0
        %535 = vmatprep.subr.mxu0 0.0
        %536 = vmatpush1.msra.mxu0 0.0
        %537 = vmatprep.subr.mxu0 0.0
        %538 = vmatpush1.msra.mxu0 0.0
        %539 = vmatprep.subr.mxu0 0.0
        %540 = vmatpush1.msra.mxu0 0.0
        %541 = vmatprep.subr.mxu0 0.0
        %542 = vmatpush1.msra.mxu0 0.0
        %543 = vmatprep.subr.mxu0 0.0
        %544 = vmatpush1.msra.mxu0 0.0
        %545 = vmatprep.subr.mxu0 0.0
        %546 = vmatpush1.msra.mxu0 0.0
        %547 = vmatprep.subr.mxu0 0.0
        %548 = vmatpush1.msra.mxu0 0.0
        %549 = vmatprep.subr.mxu0 0.0
        %550 = vmatpush1.msra.mxu0 0.0
        %551 = vmatprep.subr.mxu0 0.0
        %552 = vmatpush1.msra.mxu0 0.0
        %553 = vmatprep.subr.mxu0 0.0
        %554 = vmatpush1.msra.mxu0 0.0
        %555 = vmatprep.subr.mxu0 0.0
        %556 = vmatpush1.msra.mxu0 0.0
        %557 = vmatprep.subr.mxu0 0.0
        %558 = vmatpush1.msra.mxu0 0.0
        %559 = vmatprep.subr.mxu0 0.0
        %560 = vmatpush1.msra.mxu0 0.0
        %561 = vmatprep.subr.mxu0 0.0
        %562 = vmatpush1.msra.mxu0 0.0
        %563 = vmatprep.subr.mxu0 0.0
        %564 = vmatpush1.msra.mxu0 0.0
        %565 = vmatprep.subr.mxu0 0.0
        %566 = vmatpush1.msra.mxu0 0.0
        %567 = vmatprep.subr.mxu0 0.0
        %568 = vmatpush1.msra.mxu0 0.0
        %569 = vmatprep.subr.mxu0 0.0
        %570 = vmatpush1.msra.mxu0 0.0
        %571 = vmatprep.subr.mxu0 0.0
        %572 = vmatpush1.msra.mxu0 0.0
        %573 = vmatprep.subr.mxu0 0.0
        %574 = vmatpush1.msra.mxu0 0.0
        %575 = vmatprep.subr.mxu0 0.0
        %576 = vmatpush1.msra.mxu0 0.0
        %577 = vmatprep.subr.mxu0 0.0
        %578 = vmatpush1.msra.mxu0 0.0
        %579 = vmatprep.subr.mxu0 0.0
        %580 = vmatpush1.msra.mxu0 0.0
        %581 = vmatprep.subr.mxu0 0.0
        %582 = vmatpush1.msra.mxu0 0.0
        %583 = vmatprep.subr.mxu0 0.0
        %584 = vmatpush1.msra.mxu0 0.0
        %585 = vmatprep.subr.mxu0 0.0
        %586 = vmatpush1.msra.mxu0 0.0
        %587 = vmatprep.subr.mxu0 0.0
        %588 = vmatpush1.msra.mxu0 0.0
        %589 = vmatprep.mubr.f32.mxu0 0.0
        %590 = vmatmul.mubr.f32.gmra.mrb[0].mxu0 %v514
        %v591 = vpop.f32.mrb[0].mxu0
        %v592 = vadd.f32 %v495, %v591
        %v593 = vpop.f32.mrb[0].mxu0
        %594 = vmatprep.mubr.f32.mxu0 0.0
        %595 = vmatmul.mubr.f32.gmra.mrb[0].mxu0 %v517
        %v596 = vpop.f32.mrb[0].mxu0
        %v597 = vadd.f32 %v500, %v596
        %v598 = vpop.f32.mrb[0].mxu0
        %599 = vmatprep.mubr.f32.mxu0 0.0
        %600 = vmatmul.mubr.f32.gmra.mrb[0].mxu0 %v520
        %v601 = vpop.f32.mrb[0].mxu0
        %v602 = vadd.f32 %v505, %v601
        %v603 = vpop.f32.mrb[0].mxu0
        %604 = vmatprep.mubr.f32.mxu0 0.0
        %605 = vmatmul.mubr.f32.gmra.mrb[0].mxu0 %v523
        %v606 = vpop.f32.mrb[0].mxu0
        %v607 = vadd.f32 %v510, %v606
        %v608 = vpop.f32.mrb[0].mxu0
        %609 = vdwg.mxu0
        %v610 = vxor.u32 %v592, 2147483648
        %v611 = vxor.u32 %v597, 2147483648
        %v612 = vxor.u32 %v602, 2147483648
        %v613 = vxor.u32 %v607, 2147483648
        %v614 = vmul.f32 %v610, 1.442695
        %v615 = vpow.pop %v614
        %v616 = vmul.f32 %v611, 1.442695
        %v617 = vpow.pop %v616
        %v618 = vmul.f32 %v612, 1.442695
        %v619 = vpow.pop %v618
        %v620 = vmul.f32 %v613, 1.442695
        %v621 = vpow.pop %v620
        %v622 = vadd.f32 %v615, 1.0
        %v623 = vadd.f32 %v617, 1.0
        %v624 = vadd.f32 %v619, 1.0
        %v625 = vadd.f32 %v621, 1.0
        %v626 = vrcp.pop %v622
        %v627 = vmul.f32 1.0, %v626
        %v628 = vrcp.pop %v623
        %v629 = vmul.f32 1.0, %v628
        %v630 = vrcp.pop %v624
        %v631 = vmul.f32 1.0, %v630
        %v632 = vrcp.pop %v625
        %v633 = vmul.f32 1.0, %v632
        %v634 = vld [vmem:[%s2] sm:$0xff]
        %v635 = vld [vmem:[%s2 + $0x8] sm:$0xff]
        %v636 = vld [vmem:[%s2 + $0x10] sm:$0xff]
        %v637 = vld [vmem:[%s2 + $0x18] sm:$0xff]
        %vm638 = vcmask 130048
        %v640 = vsel %vm638, %v627, 0
        %v643 = vsel %vm638, %v629, 0
        %v646 = vsel %vm638, %v631, 0
        %v649 = vsel %vm638, %v633, 0
        %651 = vmatprep.subr.mxu0 %v635
        %652 = vmatpush1.msra.mxu0 %v634
        %653 = vmatprep.subr.mxu0 %v637
        %654 = vmatpush1.msra.mxu0 %v636
        %655 = vmatprep.subr.mxu0 0.0
        %656 = vmatpush1.msra.mxu0 0.0
        %657 = vmatprep.subr.mxu0 0.0
        %658 = vmatpush1.msra.mxu0 0.0
        %659 = vmatprep.subr.mxu0 0.0
        %660 = vmatpush1.msra.mxu0 0.0
        %661 = vmatprep.subr.mxu0 0.0
        %662 = vmatpush1.msra.mxu0 0.0
        %663 = vmatprep.subr.mxu0 0.0
        %664 = vmatpush1.msra.mxu0 0.0
        %665 = vmatprep.subr.mxu0 0.0
        %666 = vmatpush1.msra.mxu0 0.0
        %667 = vmatprep.subr.mxu0 0.0
        %668 = vmatpush1.msra.mxu0 0.0
        %669 = vmatprep.subr.mxu0 0.0
        %670 = vmatpush1.msra.mxu0 0.0
        %671 = vmatprep.subr.mxu0 0.0
        %672 = vmatpush1.msra.mxu0 0.0
        %673 = vmatprep.subr.mxu0 0.0
        %674 = vmatpush1.msra.mxu0 0.0
        %675 = vmatprep.subr.mxu0 0.0
        %676 = vmatpush1.msra.mxu0 0.0
        %677 = vmatprep.subr.mxu0 0.0
        %678 = vmatpush1.msra.mxu0 0.0
        %679 = vmatprep.subr.mxu0 0.0
        %680 = vmatpush1.msra.mxu0 0.0
        %681 = vmatprep.subr.mxu0 0.0
        %682 = vmatpush1.msra.mxu0 0.0
        %683 = vmatprep.subr.mxu0 0.0
        %684 = vmatpush1.msra.mxu0 0.0
        %685 = vmatprep.subr.mxu0 0.0
        %686 = vmatpush1.msra.mxu0 0.0
        %687 = vmatprep.subr.mxu0 0.0
        %688 = vmatpush1.msra.mxu0 0.0
        %689 = vmatprep.subr.mxu0 0.0
        %690 = vmatpush1.msra.mxu0 0.0
        %691 = vmatprep.subr.mxu0 0.0
        %692 = vmatpush1.msra.mxu0 0.0
        %693 = vmatprep.subr.mxu0 0.0
        %694 = vmatpush1.msra.mxu0 0.0
        %695 = vmatprep.subr.mxu0 0.0
        %696 = vmatpush1.msra.mxu0 0.0
        %697 = vmatprep.subr.mxu0 0.0
        %698 = vmatpush1.msra.mxu0 0.0
        %699 = vmatprep.subr.mxu0 0.0
        %700 = vmatpush1.msra.mxu0 0.0
        %701 = vmatprep.subr.mxu0 0.0
        %702 = vmatpush1.msra.mxu0 0.0
        %703 = vmatprep.subr.mxu0 0.0
        %704 = vmatpush1.msra.mxu0 0.0
        %705 = vmatprep.subr.mxu0 0.0
        %706 = vmatpush1.msra.mxu0 0.0
        %707 = vmatprep.subr.mxu0 0.0
        %708 = vmatpush1.msra.mxu0 0.0
        %709 = vmatprep.subr.mxu0 0.0
        %710 = vmatpush1.msra.mxu0 0.0
        %711 = vmatprep.subr.mxu0 0.0
        %712 = vmatpush1.msra.mxu0 0.0
        %713 = vmatprep.subr.mxu0 0.0
        %714 = vmatpush1.msra.mxu0 0.0
        %715 = vmatprep.mubr.f32.mxu0 0.0
        %716 = vmatmul.mubr.f32.gmra.mrb[0].mxu0 %v640
        %v717 = vpop.f32.mrb[0].mxu0
        %v718 = vadd.f32 0.0, %v717
        %v719 = vpop.f32.mrb[0].mxu0
        %v720 = vadd.f32 0.0, %v719
        %721 = vmatprep.mubr.f32.mxu0 0.0
        %722 = vmatmul.mubr.f32.gmra.mrb[0].mxu0 %v643
        %v723 = vpop.f32.mrb[0].mxu0
        %v724 = vadd.f32 0.0, %v723
        %v725 = vpop.f32.mrb[0].mxu0
        %v726 = vadd.f32 0.0, %v725
        %727 = vmatprep.mubr.f32.mxu0 0.0
        %728 = vmatmul.mubr.f32.gmra.mrb[0].mxu0 %v646
        %v729 = vpop.f32.mrb[0].mxu0
        %v730 = vadd.f32 0.0, %v729
        %v731 = vpop.f32.mrb[0].mxu0
        %v732 = vadd.f32 0.0, %v731
        %733 = vmatprep.mubr.f32.mxu0 0.0
        %734 = vmatmul.mubr.f32.gmra.mrb[0].mxu0 %v649
        %v735 = vpop.f32.mrb[0].mxu0
        %v736 = vadd.f32 0.0, %v735
        %v737 = vpop.f32.mrb[0].mxu0
        %v738 = vadd.f32 0.0, %v737
        %739 = vdwg.mxu0
        %v740 = vmul.f32 %v277, %v718
        %v741 = vmul.f32 %v278, %v720
        %v742 = vmul.f32 %v279, %v724
        %v743 = vmul.f32 %v280, %v726
        %v744 = vmul.f32 %v281, %v730
        %v745 = vmul.f32 %v282, %v732
        %v746 = vmul.f32 %v283, %v736
        %v747 = vmul.f32 %v284, %v738
        %748 = vst [vmem:[%s271] sm:$0xff] %v740
        %749 = vst [vmem:[%s271 + $0x8] sm:$0xff] %v741
        %750 = vst [vmem:[%s271 + $0x10] sm:$0xff] %v742
        %751 = vst [vmem:[%s271 + $0x18] sm:$0xff] %v743
        %752 = vst [vmem:[%s271 + $0x20] sm:$0xff] %v744
        %753 = vst [vmem:[%s271 + $0x28] sm:$0xff] %v745
        %754 = vst [vmem:[%s271 + $0x30] sm:$0xff] %v746
        %755 = vst [vmem:[%s271 + $0x38] sm:$0xff] %v747
        %s756 = sand.u32 %s181, 1
        %s757 = scalar_lea.sflag [#allocation3], %s756
        %s758 = sand.u32 %s181, 1
        %s759 = smul.addr %s758, 64
        %s760 = scalar_lea.vmem [#allocation2], %s759
        // Predicated region
        $region49: #{tpu_custom_call.1} parent=47 // pred_check
          %p761 = pneg %p191
        $region50: #{tpu_custom_call.1} parent=47 // pred_check_branch
          %763 = sbr.rel (%p761) target = $region52
        $region51: #{tpu_custom_call.1} parent=47 // pred_region
          %s765 = ssub.s32 1024, 1024
          %766 = vsyncadd %s757, %s765
          %s767 = smul.addr %s21, 8
          %s768 = smul.addr %s767, 128
          %s769 = scalar_lea.hbm %s7, %s768
          %s770 = sshll.u32 %s760, 4
          %s771 = int_to_ptr.vmem [resolvable:$true] %s770
          %776 = dma.vmem_to_hbm [thread:$0]  %s771, 1024, %s769, %s757, 256, 256, 16
        $region52: #{tpu_custom_call.1} parent=47 // pred_fallthru
          _
      $region48: #{tpu_custom_call.1} parent=5 // pred_fallthru
        _
      %p777 = scmp.le.s32.totalorder 2, %s16
      // Predicated region
      $region53: #{tpu_custom_call.1} parent=5 // pred_check
        %p778 = pneg %p777
      $region54: #{tpu_custom_call.1} parent=5 // pred_check_branch
        %780 = sbr.rel (%p778) target = $region56
      $region55: #{tpu_custom_call.1} parent=5 // pred_region
        %s781 = ssub.s32 %s16, 2
        // Predicated region
        $region57: #{tpu_custom_call.1} parent=55 // pred_check
          %p782 = pneg %p197
        $region58: #{tpu_custom_call.1} parent=55 // pred_check_branch
          %784 = sbr.rel (%p782) target = $region60
        $region59: #{tpu_custom_call.1} parent=55 // pred_region
          %s785 = sand.u32 %s182, 1
          %s786 = scalar_lea.sflag [#allocation3], %s785
          %s787 = sand.u32 %s182, 1
          %s788 = smul.addr %s787, 64
          %s789 = scalar_lea.vmem [#allocation2], %s788
          %790 = dma.done %s786, 1024
        $region60: #{tpu_custom_call.1} parent=55 // pred_fallthru
          _
      $region56: #{tpu_custom_call.1} parent=5 // pred_fallthru
        _
    $region6: #{tpu_custom_call.1} parent=1 // loop_footer
      %s20 = sadd.s32 1, %s16
    $region7: #{tpu_custom_call.1} parent=1 // loop_footer_branch
      %15 = sbr.rel target = $region3
    $region8: #{tpu_custom_call.1} parent=1 // loop_exit
      _
    %791 = vsyncpa [#allocation3], 1
    %s792 = scalar_lea.sflag [#allocation3], 1
    %793 = vsyncpa %s792, 1

</llo_original>
